<compile_context>
chip_gen: v7x
topology: tpu7x:2x2x1
jax: 0.10.0
libtpu: 0.0.40
codegen_flags: <defaults>
</compile_context>

<pallas_src>
import jax
import jax.numpy as jnp
from jax.experimental import pallas as pl
from jax.experimental.pallas import tpu as pltpu

LANE = 128


def _round_up(x, m):
    return ((x + m - 1) // m) * m


def _aligned_divisors(total, align=LANE):
    """All t with t % align == 0 and total % t == 0, descending. Requires total % align == 0."""
    n = total // align
    divs = set()
    d = 1
    while d * d <= n:
        if n % d == 0:
            divs.add(d)
            divs.add(n // d)
        d += 1
    return [d * align for d in sorted(divs, reverse=True)]


def _linear_kernel_fullk(x_ref, w_ref, b_ref, o_ref):
    # Single pass over K: no accumulator scratch, no pl.when phases; bias added in f32,
    # output written once in its final dtype.
    o_ref[...] = (
        jnp.dot(x_ref[...], w_ref[...], preferred_element_type=jnp.float32)
        + b_ref[...]
    ).astype(o_ref.dtype)


def _linear_kernel_ksplit(x_ref, w_ref, b_ref, o_ref, acc_ref):
    k = pl.program_id(2)
    part = jnp.dot(x_ref[...], w_ref[...], preferred_element_type=jnp.float32)

    @pl.when(k == 0)
    def _first():
        acc_ref[...] = part          # assign (not zero-init + "+="): saves a VMEM RMW

    @pl.when(k > 0)
    def _accumulate():
        acc_ref[...] += part

    @pl.when(k == pl.num_programs(2) - 1)
    def _finalize():
        o_ref[...] = (acc_ref[...] + b_ref[...]).astype(o_ref.dtype)


def make_fc_classifier(weight, bias, *, compute_dtype=jnp.bfloat16,
                       tm_max=512, tn_max=512, tk_max=2048):
    """Forward fn for nn.Linear(input_dim, n_classes): y = X @ W^T + b.

    weight: (n_classes, input_dim)  -- PyTorch Linear convention.
    bias:   (n_classes,)
    compute_dtype: jnp.bfloat16 (default, fast; f32 accumulation) or jnp.float32 (exact).
    """
    C, D = weight.shape
    Kp = _round_up(D, LANE)
    Np = _round_up(C, LANE)
    elt = jnp.dtype(compute_dtype).itemsize
    sub = 16 if elt == 2 else 8          # bf16 packs 16 rows per sublane-packed vreg tile

    # Transpose + pad + cast the parameters ONCE at init (never per forward call).
    w_p = jnp.pad(jnp.asarray(weight, jnp.float32).T,
                  ((0, Kp - D), (0, Np - C))).astype(compute_dtype)        # (Kp, Np)
    b_p = jnp.pad(jnp.asarray(bias, jnp.float32).reshape(1, C),
                  ((0, 0), (0, Np - C)))                                   # (1, Np), f32

    # Size tiles against THIS generation's VMEM; raise the scoped limit above defaults.
    try:
        vmem_cap = int(pltpu.get_tpu_info().vmem_capacity_bytes)
    except Exception:
        vmem_cap = 64 << 20              # conservative (v7x per-TensorCore VMEM)
    vmem_limit = int(min(0.85 * vmem_cap, 100 << 20))
    tile_budget = int(0.6 * vmem_limit)  # headroom for compiler scratch / semaphores

    def _vmem_use(tm, tn, tk, ksteps, out_elt):
        use = 2 * (tm * tk + tk * tn) * elt      # double-buffered X and W tiles
        use += 2 * tm * tn * out_elt             # double-buffered output tile
        use += 2 * tn * 4                        # double-buffered f32 bias tile
        if ksteps > 1:
            use += tm * tn * 4                   # resident f32 accumulator
        return use

    @jax.jit
    def forward(x):
        B = x.shape[0]
        out_dtype = x.dtype
        out_elt = jnp.dtype(out_dtype).itemsize

        # Batch tile: pad only to the dtype sublane -> minimal per-call X pad traffic.
        tm = min(tm_max, _round_up(B, sub))
        Mp = _round_up(B, tm)
        # N tile: largest lane-aligned divisor of Np under the cap.
        tn = next((t for t in _aligned_divisors(Np) if t <= tn_max), LANE)

        # Stream the larger operand from HBM exactly once when VMEM allows:
        #   weight larger (C >= B) -> collapse M to a single step (W fetched once)
        #   X larger     (B >  C) -> collapse N to a single step (both fetched once)
        if C >= B and Mp // tm > 1:
            if _vmem_use(Mp, tn, LANE, Kp // LANE, out_elt) <= tile_budget:
                tm = Mp
        elif C < B and Np // tn > 1:
            if _vmem_use(tm, Np, LANE, Kp // LANE, out_elt) <= tile_budget:
                tn = Np

        # K tile: largest aligned divisor of Kp fitting VMEM; prefer the full panel so the
        # reduction axis / accumulator / finalize disappear entirely.
        tk = LANE
        for cand in _aligned_divisors(Kp):
            if cand <= tk_max and _vmem_use(tm, tn, cand, Kp // cand, out_elt) <= tile_budget:
                tk = cand
                break
        ksteps = Kp // tk
        msteps, nsteps = Mp // tm, Np // tn

        # v7x has 2 TensorCores: keep >= 2 steps on a "parallel" axis when the problem is
        # large enough for megacore sharding to matter.
        if msteps * nsteps == 1 and (Mp * Kp + Kp * Np) * elt > (8 << 20):
            if tm % (2 * sub) == 0:
                tm //= 2
            elif tn % (2 * LANE) == 0:
                tn //= 2
            msteps, nsteps = Mp // tm, Np // tn

        # Pad + cast X (zero padding is benign in the reduction and sliced off below).
        x_p = jnp.pad(jnp.asarray(x).astype(compute_dtype),
                      ((0, Mp - B), (0, Kp - D)))

        cost = pl.CostEstimate(
            flops=2 * B * D * C,
            transcendentals=0,
            bytes_accessed=int(elt * (B * D + D * C) + out_elt * B * C + 4 * C),
        )
        cparams_2d = pltpu.CompilerParams(
            dimension_semantics=("parallel", "parallel"),
            vmem_limit_bytes=vmem_limit,
        )
        cparams_3d = pltpu.CompilerParams(
            dimension_semantics=("parallel", "parallel", "arbitrary"),
            vmem_limit_bytes=vmem_limit,
        )

        if ksteps == 1:
            out_p = pl.pallas_call(
                _linear_kernel_fullk,
                out_shape=jax.ShapeDtypeStruct((Mp, Np), out_dtype),
                grid_spec=pltpu.PrefetchScalarGridSpec(
                    num_scalar_prefetch=0,
                    grid=(msteps, nsteps),
                    in_specs=[
                        pl.BlockSpec((tm, Kp), lambda i, j: (i, 0)),   # X row panel
                        pl.BlockSpec((Kp, tn), lambda i, j: (0, j)),   # full-K W panel
                        pl.BlockSpec((1, tn), lambda i, j: (0, j)),    # bias (f32)
                    ],
                    out_specs=pl.BlockSpec((tm, tn), lambda i, j: (i, j)),
                ),
                compiler_params=cparams_2d,
                cost_estimate=cost,
            )(x_p, w_p, b_p)
        else:
            out_p = pl.pallas_call(
                _linear_kernel_ksplit,
                out_shape=jax.ShapeDtypeStruct((Mp, Np), out_dtype),
                grid_spec=pltpu.PrefetchScalarGridSpec(
                    num_scalar_prefetch=0,
                    grid=(msteps, nsteps, ksteps),
                    in_specs=[
                        pl.BlockSpec((tm, tk), lambda i, j, k: (i, k)),
                        pl.BlockSpec((tk, tn), lambda i, j, k: (k, j)),
                        pl.BlockSpec((1, tn), lambda i, j, k: (0, j)),
                    ],
                    out_specs=pl.BlockSpec((tm, tn), lambda i, j, k: (i, j)),
                    scratch_shapes=[pltpu.VMEM((tm, tn), jnp.float32)],
                ),
                compiler_params=cparams_3d,
                cost_estimate=cost,
            )(x_p, w_p, b_p)

        # Output is already in its final dtype; just strip the padding.
        return out_p[:B, :C]

    return forward


if __name__ == "__main__":
    # Small shapes consistent with the module: batch=8, input_dim=32, n_classes=16.
    B, input_dim, n_classes = 8, 32, 16

    key = jax.random.PRNGKey(0)
    kx, kw, kb = jax.random.split(key, 3)

    x = jax.random.normal(kx, (B, input_dim), dtype=jnp.float32)
    # Deterministic param init (mimics nn.Linear's uniform(-1/sqrt(fan_in), 1/sqrt(fan_in))).
    bound = 1.0 / jnp.sqrt(jnp.float32(input_dim))
    weight = jax.random.uniform(kw, (n_classes, input_dim), dtype=jnp.float32,
                                minval=-bound, maxval=bound)
    bias = jax.random.uniform(kb, (n_classes,), dtype=jnp.float32,
                              minval=-bound, maxval=bound)

    ref = x @ weight.T + bias

    # Fast default path: bf16 operands, f32 accumulation (tolerance relaxed accordingly).
    fc_bf16 = make_fc_classifier(weight, bias)
    out = jax.block_until_ready(fc_bf16(x))
    assert out.shape == (B, n_classes) and out.dtype == x.dtype
    assert jnp.allclose(out, ref, atol=2e-2, rtol=2e-2)

    # Exact opt-in path matches the f32 reference tightly.
    fc_f32 = make_fc_classifier(weight, bias, compute_dtype=jnp.float32)
    out32 = jax.block_until_ready(fc_f32(x))
    assert jnp.allclose(out32, ref, atol=1e-5, rtol=1e-5)

    print("KERNEL_OK")
</pallas_src>

<mosaic_0001>
module attributes {stable_mosaic.version = 11 : i64} {
  func.func @_linear_kernel_fullk(%arg0: i32, %arg1: i32, %arg2: memref<16x128xbf16, #tpu.memory_space<vmem>>, %arg3: memref<128x128xbf16, #tpu.memory_space<vmem>>, %arg4: memref<1x128xf32, #tpu.memory_space<vmem>>, %arg5: memref<16x128xf32, #tpu.memory_space<vmem>>) attributes {dimension_semantics = [#tpu.dimension_semantics<parallel>, #tpu.dimension_semantics<parallel>], iteration_bounds = array<i64: 1, 1>, scalar_prefetch = 0 : i64, scratch_operands = 0 : i64, tpu.core_type = #tpu.core_type<tc>, window_params = [{transform_indices = @transform_0, window_bounds = array<i64: 16, 128>}, {transform_indices = @transform_1, window_bounds = array<i64: 128, 128>}, {transform_indices = @transform_2, window_bounds = array<i64: 1, 128>}, {transform_indices = @transform_3, window_bounds = array<i64: 16, 128>}]} {
    %c0 = arith.constant 0 : index
    %c0_0 = arith.constant 0 : index
    %0 = vector.load %arg2[%c0, %c0_0] : memref<16x128xbf16, #tpu.memory_space<vmem>>, vector<16x128xbf16>
    %c0_1 = arith.constant 0 : index
    %c0_2 = arith.constant 0 : index
    %1 = vector.load %arg3[%c0_1, %c0_2] : memref<128x128xbf16, #tpu.memory_space<vmem>>, vector<128x128xbf16>
    %cst = arith.constant dense<0.000000e+00> : vector<16x128xf32>
    %2 = tpu.matmul %0, %1, %cst {dimension_numbers = #tpu.dot_dimension_numbers<[1], [0], [0], [1], [0, 0, 1, 1], [], []>} : vector<16x128xbf16>, vector<128x128xbf16>, vector<16x128xf32> -> vector<16x128xf32>
    %c0_3 = arith.constant 0 : index
    %c0_4 = arith.constant 0 : index
    %3 = vector.load %arg4[%c0_3, %c0_4] : memref<1x128xf32, #tpu.memory_space<vmem>>, vector<1x128xf32>
    %4 = vector.broadcast %3 : vector<1x128xf32> to vector<16x128xf32>
    %5 = arith.addf %2, %4 : vector<16x128xf32>
    %c0_5 = arith.constant 0 : index
    %c0_6 = arith.constant 0 : index
    %6 = vector.load %arg5[%c0_5, %c0_6] : memref<16x128xf32, #tpu.memory_space<vmem>>, vector<16x128xf32>
    tpu.vector_store %arg5[%c0_5, %c0_6], %5 {strides = array<i32>} : memref<16x128xf32, #tpu.memory_space<vmem>>, vector<16x128xf32>,
    return
  }
  func.func @transform_0(%arg0: i32, %arg1: i32) -> (i32, i32) {
    %c0_i32 = arith.constant 0 : i32
    %c0_i32_0 = arith.constant 0 : i32
    return %arg0, %c0_i32 : i32, i32
  }
  func.func @transform_1(%arg0: i32, %arg1: i32) -> (i32, i32) {
    %c0_i32 = arith.constant 0 : i32
    %c0_i32_0 = arith.constant 0 : i32
    return %c0_i32, %arg1 : i32, i32
  }
  func.func @transform_2(%arg0: i32, %arg1: i32) -> (i32, i32) {
    %c0_i32 = arith.constant 0 : i32
    %c0_i32_0 = arith.constant 0 : i32
    return %c0_i32, %arg1 : i32, i32
  }
  func.func @transform_3(%arg0: i32, %arg1: i32) -> (i32, i32) {
    %c0_i32 = arith.constant 0 : i32
    return %arg0, %arg1 : i32, i32
  }
}

</mosaic_0001>

<llo_original>
// kernel: forward.1
$region0: #{forward.1}
  #allocation0 [shape = 'u32[]', space=smem, size = 0x4, offset = 0x4, fixed_abs, tag = 'smem constant byte address 0x4 - core index']
  #allocation1 [shape = 'u32[144,128]{1,0:T(1,128)}', space=vmem, size = 0x12000, scoped, tag = 'internal scratch']
  %s0 = inlined_call_operand.vmem [shape: bf16[16,128], index: 0, kind: input, shape index: {}]
  %s1 = inlined_call_operand.hbm [shape: bf16[128,128], index: 1, kind: input, shape index: {}]
  %s2 = inlined_call_operand.vmem [shape: f32[1,128], index: 2, kind: input, shape index: {}]
  %s3 = inlined_call_operand.vmem [shape: f32[16,128], index: 3, kind: output, shape index: {}]
  %s4 = sld [smem:[#allocation0]]
  $region26: #{forward.1} parent=0
    _
  %s6 = ssub.s32 1, %s4
  %s7 = scalar_select 0, %s6, %s4
  $region1: #{forward.1} parent=0
    #allocation2 [shape = 'u8[32768]{0}', space=vmem, size = 0x8000, scoped, tag = 'input window, operand 1, single buffered']
    #allocation3 [shape = 's32[1]{0}', space=sflag, size = 0x4, scoped, tag = 'scoped memory for forward.1']
    %8 = vsyncpa [#allocation3], 0
    // Predicated region
    $region2: #{forward.1} parent=1 // pred_check
      _
    $region3: #{forward.1} parent=1 // pred_check_branch
      %10 = sbr.rel (0) target = $region5
    $region4: #{forward.1} parent=1 // pred_region
      _
    $region5: #{forward.1} parent=1 // pred_fallthru
      _
    // Predicated region
    $region6: #{forward.1} parent=1 // pred_check
      _
    $region7: #{forward.1} parent=1 // pred_check_branch
      %12 = sbr.rel (0) target = $region9
    $region8: #{forward.1} parent=1 // pred_region
      %s14 = ssub.s32 1024, 1024
      %15 = vsyncadd [#allocation3], %s14
      %s16 = sshll.u32 [#allocation2], 4
      %s17 = int_to_ptr.vmem [resolvable:$true] %s16
      %22 = dma.hbm_to_vmem [thread:$0]  %s1, 1024, %s17, [#allocation3], 64, 64, 4
    $region9: #{forward.1} parent=1 // pred_fallthru
      _
    // Predicated region
    $region10: #{forward.1} parent=1 // pred_check
      _
    $region11: #{forward.1} parent=1 // pred_check_branch
      %24 = sbr.rel (0) target = $region13
    $region12: #{forward.1} parent=1 // pred_region
      _
    $region13: #{forward.1} parent=1 // pred_fallthru
      _
    // Predicated region
    $region14: #{forward.1} parent=1 // pred_check
      _
    $region15: #{forward.1} parent=1 // pred_check_branch
      %26 = sbr.rel (0) target = $region17
    $region16: #{forward.1} parent=1 // pred_region
      %27 = dma.done [#allocation3], 1024
    $region17: #{forward.1} parent=1 // pred_fallthru
      _
    %v29 = vld [vmem:[%s0] sm:$0xf]
    %v30 = vld [vmem:[%s0 + $0x4] sm:$0xf]
    %v31 = vld [vmem:[#allocation2] sm:$0xf]
    %v32 = vld [vmem:[#allocation2 + $0x4] sm:$0xf]
    %v33 = vld [vmem:[#allocation2 + $0x8] sm:$0xf]
    %v34 = vld [vmem:[#allocation2 + $0xc] sm:$0xf]
    %v35 = vld [vmem:[#allocation2 + $0x10] sm:$0xf]
    %v36 = vld [vmem:[#allocation2 + $0x14] sm:$0xf]
    %v37 = vld [vmem:[#allocation2 + $0x18] sm:$0xf]
    %v38 = vld [vmem:[#allocation2 + $0x1c] sm:$0xf]
    %v39 = vld [vmem:[#allocation2 + $0x20] sm:$0xf]
    %v40 = vld [vmem:[#allocation2 + $0x24] sm:$0xf]
    %v41 = vld [vmem:[#allocation2 + $0x28] sm:$0xf]
    %v42 = vld [vmem:[#allocation2 + $0x2c] sm:$0xf]
    %v43 = vld [vmem:[#allocation2 + $0x30] sm:$0xf]
    %v44 = vld [vmem:[#allocation2 + $0x34] sm:$0xf]
    %v45 = vld [vmem:[#allocation2 + $0x38] sm:$0xf]
    %v46 = vld [vmem:[#allocation2 + $0x3c] sm:$0xf]
    %v47 = vld [vmem:[%s2] sm:$0x1]
    %v49 = vlaneseq
    %v50 = vshrl.u32 %v49, 7
    %v51 = vsub.s32 0, %v50
    %v52 = vrot.slane %v47, %v51
    %v56 = vunpack.c.l.b16 %v29
    %v57 = vunpack.c.l.b16 %v30
    %v58 = vpack.c.b16 %v57, %v56
    %v76 = vunpack.c.l.b16 %v31
    %v77 = vunpack.c.l.b16 %v32
    %v78 = vunpack.c.l.b16 %v33
    %v79 = vunpack.c.l.b16 %v34
    %v80 = vunpack.c.l.b16 %v35
    %v81 = vunpack.c.l.b16 %v36
    %v82 = vunpack.c.l.b16 %v37
    %v83 = vunpack.c.l.b16 %v38
    %v84 = vunpack.c.l.b16 %v39
    %v85 = vunpack.c.l.b16 %v40
    %v86 = vunpack.c.l.b16 %v41
    %v87 = vunpack.c.l.b16 %v42
    %v88 = vunpack.c.l.b16 %v43
    %v89 = vunpack.c.l.b16 %v44
    %v90 = vunpack.c.l.b16 %v45
    %v91 = vunpack.c.l.b16 %v46
    %v92 = vpack.c.b16 %v77, %v76
    %v93 = vpack.c.b16 %v79, %v78
    %v94 = vpack.c.b16 %v81, %v80
    %v95 = vpack.c.b16 %v83, %v82
    %v96 = vpack.c.b16 %v85, %v84
    %v97 = vpack.c.b16 %v87, %v86
    %v98 = vpack.c.b16 %v89, %v88
    %v99 = vpack.c.b16 %v91, %v90
    %108 = vmatprep.subr.bf16.mxu0 0
    %109 = vmatpush1.bf16.msra.mxu0 %v92
    %110 = vmatprep.subr.bf16.mxu0 0
    %111 = vmatpush1.bf16.msra.mxu0 %v93
    %112 = vmatprep.subr.bf16.mxu0 0
    %113 = vmatpush1.bf16.msra.mxu0 %v94
    %114 = vmatprep.subr.bf16.mxu0 0
    %115 = vmatpush1.bf16.msra.mxu0 %v95
    %116 = vmatprep.subr.bf16.mxu0 0
    %117 = vmatpush1.bf16.msra.mxu0 %v96
    %118 = vmatprep.subr.bf16.mxu0 0
    %119 = vmatpush1.bf16.msra.mxu0 %v97
    %120 = vmatprep.subr.bf16.mxu0 0
    %121 = vmatpush1.bf16.msra.mxu0 %v98
    %122 = vmatprep.subr.bf16.mxu0 0
    %123 = vmatpush1.bf16.msra.mxu0 %v99
    %124 = vmatprep.subr.bf16.mxu0 0
    %125 = vmatpush1.bf16.msra.mxu0 0
    %126 = vmatprep.subr.bf16.mxu0 0
    %127 = vmatpush1.bf16.msra.mxu0 0
    %128 = vmatprep.subr.bf16.mxu0 0
    %129 = vmatpush1.bf16.msra.mxu0 0
    %130 = vmatprep.subr.bf16.mxu0 0
    %131 = vmatpush1.bf16.msra.mxu0 0
    %132 = vmatprep.subr.bf16.mxu0 0
    %133 = vmatpush1.bf16.msra.mxu0 0
    %134 = vmatprep.subr.bf16.mxu0 0
    %135 = vmatpush1.bf16.msra.mxu0 0
    %136 = vmatprep.subr.bf16.mxu0 0
    %137 = vmatpush1.bf16.msra.mxu0 0
    %138 = vmatprep.subr.bf16.mxu0 0
    %139 = vmatpush1.bf16.msra.mxu0 0
    %140 = vmatprep.mubr.bf16.mxu0 0
    %141 = vmatmul.mubr.bf16.gmra.mrb[0].mxu0 %v58
    %v142 = vpop.f32.mrb[0].mxu0
    %v143 = vadd.f32 %v52, %v142
    %v144 = vpop.f32.mrb[0].mxu0
    %v145 = vpop.f32.mrb[0].mxu0
    %v146 = vadd.f32 %v52, %v145
    %v147 = vpop.f32.mrb[0].mxu0
    %148 = vdwg.mxu0
    %149 = vst [vmem:[%s3] sm:$0xff] %v143
    %150 = vst [vmem:[%s3 + $0x8] sm:$0xff] %v146
    // Predicated region
    $region18: #{forward.1} parent=1 // pred_check
      _
    $region19: #{forward.1} parent=1 // pred_check_branch
      %152 = sbr.rel (0) target = $region21
    $region20: #{forward.1} parent=1 // pred_region
      _
    $region21: #{forward.1} parent=1 // pred_fallthru
      _
    // Predicated region
    $region22: #{forward.1} parent=1 // pred_check
      _
    $region23: #{forward.1} parent=1 // pred_check_branch
      %154 = sbr.rel (0) target = $region25
    $region24: #{forward.1} parent=1 // pred_region
      _
    $region25: #{forward.1} parent=1 // pred_fallthru
      _
    %155 = vsyncpa [#allocation3], 1

</llo_original>
